<compile_context>
chip_gen: v6e
topology: v6e:2x2x1
jax: 0.10.0
libtpu: 0.0.40
codegen_flags: <defaults>
</compile_context>

<pallas_src>
from functools import partial

import jax
import jax.numpy as jnp
from jax.experimental import pallas as pl
from jax.experimental.pallas import tpu as pltpu

N_TIMESTEPS = 1000
GUIDANCE_SCALE = 5.0


def _denoise_kernel(x_ref, w_eps_ref, w_bias_ref, cond_ref, sc_ref, out_ref):
    """Fused stand-in eps prediction + CFG + denoise over one spatial tile.

    x_ref     : (B*C, St)     VMEM   batch-stacked latents (St lanes)
    w_eps_ref : (B*C, B*C)    VMEM   block-diag 1x1-conv (channel mixing) weights
    w_bias_ref: (B*C, B*D)    VMEM   block-diag conditioning->channel projection (pre-transposed)
    cond_ref  : (B*D, 2)      VMEM   pooled text embeddings, cols = [cond, uncond]
    sc_ref    : (4,)          SMEM   [1/sqrt(acp), sqrt(1-acp)/sqrt(acp), guidance, guidance*t_emb]
    out_ref   : (B*C, St)     VMEM   predicted denoised latents
    """
    x = x_ref[...]                                               # (BC, St)

    # stand-in "UNet": batched 1x1 conv as ONE block-diagonal MXU matmul
    conv = jnp.dot(w_eps_ref[...], x,
                   preferred_element_type=jnp.float32)           # (BC, St)

    # both conditioning projections in ONE matmul, already in sublane
    # (channel-stacked) orientation -> no lane->sublane relayout needed.
    bias_cu = jnp.dot(w_bias_ref[...], cond_ref[...],
                      preferred_element_type=jnp.float32)        # (BC, 2)
    bias_c = bias_cu[:, 0:1]                                     # (BC, 1)
    bias_u = bias_cu[:, 1:2]                                     # (BC, 1)

    g = sc_ref[2]
    g_t = sc_ref[3]                                              # guidance * t_emb (pre-folded)
    # CFG algebra: eps = conv + bias_u + g*(bias_c - bias_u) + g*t_emb  (conv cancels in the diff)
    bias = bias_u + g * (bias_c - bias_u) + g_t                  # (BC, 1)

    # denoise, scalars pre-folded:  out = x/sqrt(acp) - sqrt(1-acp)/sqrt(acp) * eps
    inv_sqrt_acp = sc_ref[0]
    scale = sc_ref[1]
    out_ref[...] = x * inv_sqrt_acp - scale * (conv + bias)


@partial(jax.jit, static_argnames=("guidance_scale",))
def text2image_forward(latents, conditioning, index, w_eps, w_cond,
                       alphas_cumprod, guidance_scale=GUIDANCE_SCALE):
    """latents: (B, C, H, W) NCHW; conditioning: (2B, T, D) [cond ; uncond]."""
    B, C, H, W = latents.shape
    S = H * W
    D = conditioning.shape[-1]
    BC = B * C

    # Fold batch into the sublane axis: (B*C, S) -> full (8,128) vregs.
    x = latents.astype(jnp.float32).reshape(BC, S)

    # glue: pool the token axis of the context (stand-in for cross-attention)
    pooled_c = jnp.mean(conditioning[:B], axis=1).astype(jnp.float32)    # (B, D)
    pooled_u = jnp.mean(conditioning[B:], axis=1).astype(jnp.float32)    # (B, D)
    # columns: [conditioned, unconditional]; batch stacked along rows (b*D + d)
    cond_both = jnp.stack([pooled_c.reshape(B * D),
                           pooled_u.reshape(B * D)], axis=1)             # (B*D, 2)

    # Block-diagonal weights so the batched 1x1-conv and the conditioning
    # projection each become a single MXU matmul inside the kernel.
    eye_b = jnp.eye(B, dtype=jnp.float32)
    w_block = jnp.kron(eye_b, w_eps.astype(jnp.float32))                 # (B*C, B*C)
    w_bias_block = jnp.kron(eye_b, w_cond.T.astype(jnp.float32))         # (B*C, B*D)

    acp = alphas_cumprod[index].astype(jnp.float32)
    inv_sqrt_acp = 1.0 / jnp.sqrt(acp)
    scale = jnp.sqrt(1.0 - acp) * inv_sqrt_acp
    t_emb = jnp.asarray(index, jnp.float32) / jnp.float32(N_TIMESTEPS)
    g = jnp.float32(guidance_scale)
    scalars = jnp.stack([inv_sqrt_acp, scale, g, g * t_emb]).astype(jnp.float32)

    # Adaptive lane tiling: for small latents run a single grid step (per-step
    # overhead paid once on single-TC v5e/v6e); only split into 2 "parallel"
    # tiles (for v7x's dual TensorCores) when each half is still >= 512 lanes.
    n_s_tiles = 2 if (S % 256 == 0 and S >= 1024) else 1
    s_tile = S // n_s_tiles

    flops = 2 * BC * BC * S + 2 * BC * (B * D) * 2 + 5 * BC * S
    bytes_accessed = 4 * (2 * BC * S + BC * BC + BC * B * D + B * D * 2)

    out = pl.pallas_call(
        _denoise_kernel,
        out_shape=jax.ShapeDtypeStruct((BC, S), jnp.float32),
        grid=(n_s_tiles,),
        in_specs=[
            pl.BlockSpec((BC, s_tile), lambda j: (0, j)),
            pl.BlockSpec((BC, BC), lambda j: (0, 0)),
            pl.BlockSpec((BC, B * D), lambda j: (0, 0)),
            pl.BlockSpec((B * D, 2), lambda j: (0, 0)),
            pl.BlockSpec(memory_space=pltpu.MemorySpace.SMEM),
        ],
        out_specs=pl.BlockSpec((BC, s_tile), lambda j: (0, j)),
        compiler_params=pltpu.CompilerParams(
            dimension_semantics=("parallel",)),
        cost_estimate=pl.CostEstimate(flops=flops, transcendentals=0,
                                      bytes_accessed=bytes_accessed),
    )(x, w_block, w_bias_block, cond_both, scalars)

    return out.reshape(B, C, H, W)


def _reference_forward(latents, conditioning, index, w_eps, w_cond,
                       alphas_cumprod, guidance_scale=GUIDANCE_SCALE):
    """Pure-JAX reference of the same math (for validation)."""
    B, C, H, W = latents.shape
    x = latents.reshape(B, C, H * W).astype(jnp.float32)
    conv = jnp.einsum("oc,bcs->bos", w_eps, x)
    bias_c = jnp.mean(conditioning[:B], axis=1) @ w_cond            # (B, C)
    bias_u = jnp.mean(conditioning[B:], axis=1) @ w_cond            # (B, C)
    t_emb = index / N_TIMESTEPS
    eps_c = conv + bias_c[:, :, None] + t_emb
    eps_u = conv + bias_u[:, :, None]
    eps = eps_u + guidance_scale * (eps_c - eps_u)
    acp = alphas_cumprod[index]
    out = (x - jnp.sqrt(1.0 - acp) * eps) / jnp.sqrt(acp)
    return out.reshape(B, C, H, W)


if __name__ == "__main__":
    key = jax.random.PRNGKey(0)
    B, C, H, W = 2, 4, 16, 16          # latent_shape: 4 channels, H/8 x W/8 spatial
    T, D = 8, 32                       # small stand-in for (77, 1280) text context
    index = 500

    k1, k2, k3, k4 = jax.random.split(key, 4)
    latents = jax.random.normal(k1, (B, C, H, W), jnp.float32)
    conditioning = jax.random.normal(k2, (2 * B, T, D), jnp.float32)

    # deterministic synthetic parameters
    w_eps = 0.1 * jax.random.normal(k3, (C, C), jnp.float32)
    w_cond = 0.1 * jax.random.normal(k4, (D, C), jnp.float32)
    betas = jnp.linspace(1e-4, 2e-2, N_TIMESTEPS, dtype=jnp.float32)  # LDM linear schedule
    alphas_cumprod = jnp.cumprod(1.0 - betas)

    out = text2image_forward(latents, conditioning, index, w_eps, w_cond,
                             alphas_cumprod)
    out = jax.block_until_ready(out)

    ref = _reference_forward(latents, conditioning, index, w_eps, w_cond,
                             alphas_cumprod)
    assert out.shape == (B, C, H, W)
    assert jnp.allclose(out, ref, atol=1e-4, rtol=1e-4), "mismatch vs reference"

    print("KERNEL_OK")
</pallas_src>

<mosaic_0001>
module attributes {stable_mosaic.version = 11 : i64} {
  func.func @_denoise_kernel(%arg0: i32, %arg1: memref<8x256xf32, #tpu.memory_space<vmem>>, %arg2: memref<8x8xf32, #tpu.memory_space<vmem>>, %arg3: memref<8x64xf32, #tpu.memory_space<vmem>>, %arg4: memref<64x2xf32, #tpu.memory_space<vmem>>, %arg5: memref<4xf32, #tpu.memory_space<smem>>, %arg6: memref<8x256xf32, #tpu.memory_space<vmem>>) attributes {dimension_semantics = [#tpu.dimension_semantics<parallel>], iteration_bounds = array<i64: 1>, scalar_prefetch = 0 : i64, scratch_operands = 0 : i64, tpu.core_type = #tpu.core_type<tc>, window_params = [{transform_indices = @transform_0, window_bounds = array<i64: 8, 256>}, {pipeline_mode = #tpu.pipeline_mode<synchronous>, transform_indices = @transform_1, window_bounds = array<i64: 8, 8>}, {pipeline_mode = #tpu.pipeline_mode<synchronous>, transform_indices = @transform_2, window_bounds = array<i64: 8, 64>}, {pipeline_mode = #tpu.pipeline_mode<synchronous>, transform_indices = @transform_3, window_bounds = array<i64: 64, 2>}, {transform_indices = @transform_4, window_bounds = array<i64: 4>}, {transform_indices = @transform_5, window_bounds = array<i64: 8, 256>}]} {
    %c0 = arith.constant 0 : index
    %c0_0 = arith.constant 0 : index
    %0 = vector.load %arg1[%c0, %c0_0] : memref<8x256xf32, #tpu.memory_space<vmem>>, vector<8x256xf32>
    %c0_1 = arith.constant 0 : index
    %c0_2 = arith.constant 0 : index
    %1 = vector.load %arg2[%c0_1, %c0_2] : memref<8x8xf32, #tpu.memory_space<vmem>>, vector<8x8xf32>
    %cst = arith.constant dense<0.000000e+00> : vector<8x256xf32>
    %2 = tpu.matmul %1, %0, %cst {dimension_numbers = #tpu.dot_dimension_numbers<[1], [0], [0], [1], [0, 0, 1, 1], [], []>} : vector<8x8xf32>, vector<8x256xf32>, vector<8x256xf32> -> vector<8x256xf32>
    %c0_3 = arith.constant 0 : index
    %c0_4 = arith.constant 0 : index
    %3 = vector.load %arg3[%c0_3, %c0_4] : memref<8x64xf32, #tpu.memory_space<vmem>>, vector<8x64xf32>
    %c0_5 = arith.constant 0 : index
    %c0_6 = arith.constant 0 : index
    %4 = vector.load %arg4[%c0_5, %c0_6] : memref<64x2xf32, #tpu.memory_space<vmem>>, vector<64x2xf32>
    %cst_7 = arith.constant dense<0.000000e+00> : vector<8x2xf32>
    %5 = tpu.matmul %3, %4, %cst_7 {dimension_numbers = #tpu.dot_dimension_numbers<[1], [0], [0], [1], [0, 0, 1, 1], [], []>} : vector<8x64xf32>, vector<64x2xf32>, vector<8x2xf32> -> vector<8x2xf32>
    %6 = vector.extract_strided_slice %5 {offsets = [0, 0], sizes = [8, 1], strides = [1, 1]} : vector<8x2xf32> to vector<8x1xf32>
    %7 = vector.extract_strided_slice %5 {offsets = [0, 1], sizes = [8, 1], strides = [1, 1]} : vector<8x2xf32> to vector<8x1xf32>
    %c2 = arith.constant 2 : index
    %8 = memref.load %arg5[%c2] : memref<4xf32, #tpu.memory_space<smem>>
    %c3 = arith.constant 3 : index
    %9 = memref.load %arg5[%c3] : memref<4xf32, #tpu.memory_space<smem>>
    %10 = arith.subf %6, %7 : vector<8x1xf32>
    %11 = vector.broadcast %8 : f32 to vector<8x1xf32>
    %12 = arith.mulf %11, %10 : vector<8x1xf32>
    %13 = arith.addf %7, %12 : vector<8x1xf32>
    %14 = vector.broadcast %9 : f32 to vector<8x1xf32>
    %15 = arith.addf %13, %14 : vector<8x1xf32>
    %c0_8 = arith.constant 0 : index
    %16 = memref.load %arg5[%c0_8] : memref<4xf32, #tpu.memory_space<smem>>
    %c1 = arith.constant 1 : index
    %17 = memref.load %arg5[%c1] : memref<4xf32, #tpu.memory_space<smem>>
    %18 = vector.broadcast %16 : f32 to vector<8x256xf32>
    %19 = arith.mulf %0, %18 : vector<8x256xf32>
    %20 = vector.broadcast %15 : vector<8x1xf32> to vector<8x256xf32>
    %21 = arith.addf %2, %20 : vector<8x256xf32>
    %22 = vector.broadcast %17 : f32 to vector<8x256xf32>
    %23 = arith.mulf %22, %21 : vector<8x256xf32>
    %24 = arith.subf %19, %23 : vector<8x256xf32>
    %c0_9 = arith.constant 0 : index
    %c0_10 = arith.constant 0 : index
    %25 = vector.load %arg6[%c0_9, %c0_10] : memref<8x256xf32, #tpu.memory_space<vmem>>, vector<8x256xf32>
    tpu.vector_store %arg6[%c0_9, %c0_10], %24 {strides = array<i32>} : memref<8x256xf32, #tpu.memory_space<vmem>>, vector<8x256xf32>,
    return
  }
  func.func @transform_0(%arg0: i32) -> (i32, i32) {
    %c0_i32 = arith.constant 0 : i32
    %c0_i32_0 = arith.constant 0 : i32
    return %c0_i32, %arg0 : i32, i32
  }
  func.func @transform_1(%arg0: i32) -> (i32, i32) {
    %c0_i32 = arith.constant 0 : i32
    %c0_i32_0 = arith.constant 0 : i32
    %c0_i32_1 = arith.constant 0 : i32
    return %c0_i32, %c0_i32_0 : i32, i32
  }
  func.func @transform_2(%arg0: i32) -> (i32, i32) {
    %c0_i32 = arith.constant 0 : i32
    %c0_i32_0 = arith.constant 0 : i32
    %c0_i32_1 = arith.constant 0 : i32
    return %c0_i32, %c0_i32_0 : i32, i32
  }
  func.func @transform_3(%arg0: i32) -> (i32, i32) {
    %c0_i32 = arith.constant 0 : i32
    %c0_i32_0 = arith.constant 0 : i32
    %c0_i32_1 = arith.constant 0 : i32
    return %c0_i32, %c0_i32_0 : i32, i32
  }
  func.func @transform_4(%arg0: i32) -> i32 {
    %c0_i32 = arith.constant 0 : i32
    %c0_i32_0 = arith.constant 0 : i32
    return %c0_i32 : i32
  }
  func.func @transform_5(%arg0: i32) -> (i32, i32) {
    %c0_i32 = arith.constant 0 : i32
    %c0_i32_0 = arith.constant 0 : i32
    return %c0_i32, %arg0 : i32, i32
  }
}

</mosaic_0001>

<llo_original>
// kernel: text2image_forward.1
$region0: #{text2image_forward.1}
  #allocation0 [shape = 'u32[]', space=smem, size = 0x4, offset = 0x4, fixed_abs, tag = 'smem constant byte address 0x4 - core index']
  #allocation1 [shape = 'u32[144,128]{1,0:T(1,128)}', space=vmem, size = 0x12000, scoped, tag = 'internal scratch']
  %s0 = inlined_call_operand.vmem [shape: f32[8,256], index: 0, kind: input, shape index: {}]
  %s1 = inlined_call_operand.vmem [shape: f32[8,8], index: 1, kind: input, shape index: {}]
  %s2 = inlined_call_operand.vmem [shape: f32[8,64], index: 2, kind: input, shape index: {}]
  %s3 = inlined_call_operand.vmem [shape: f32[64,2], index: 3, kind: input, shape index: {}]
  %s4 = inlined_call_operand.vmem [shape: f32[4], index: 4, kind: input, shape index: {}]
  %s5 = inlined_call_operand.vmem [shape: f32[8,256], index: 5, kind: output, shape index: {}]
  %s6 = sld [smem:[#allocation0]]
  $region34: #{text2image_forward.1} parent=0
    _
  %s8 = ssub.s32 1, %s6
  %s9 = scalar_select 0, %s8, %s6
  $region1: #{text2image_forward.1} parent=0
    #allocation2 [shape = 'u8[512]{0}', space=smem, size = 0x200, scoped, tag = 'input window, operand 4, single buffered']
    #allocation3 [shape = 's32[1]{0}', space=sflag, size = 0x4, scoped, tag = 'scoped memory for text2image_forward.1']
    %10 = vsyncpa [#allocation3], 0
    // Predicated region
    $region2: #{text2image_forward.1} parent=1 // pred_check
      _
    $region3: #{text2image_forward.1} parent=1 // pred_check_branch
      %12 = sbr.rel (0) target = $region5
    $region4: #{text2image_forward.1} parent=1 // pred_region
      _
    $region5: #{text2image_forward.1} parent=1 // pred_fallthru
      _
    // Predicated region
    $region6: #{text2image_forward.1} parent=1 // pred_check
      _
    $region7: #{text2image_forward.1} parent=1 // pred_check_branch
      %14 = sbr.rel (0) target = $region9
    $region8: #{text2image_forward.1} parent=1 // pred_region
      _
    $region9: #{text2image_forward.1} parent=1 // pred_fallthru
      _
    // Predicated region
    $region10: #{text2image_forward.1} parent=1 // pred_check
      _
    $region11: #{text2image_forward.1} parent=1 // pred_check_branch
      %16 = sbr.rel (0) target = $region13
    $region12: #{text2image_forward.1} parent=1 // pred_region
      _
    $region13: #{text2image_forward.1} parent=1 // pred_fallthru
      _
    // Predicated region
    $region14: #{text2image_forward.1} parent=1 // pred_check
      _
    $region15: #{text2image_forward.1} parent=1 // pred_check_branch
      %18 = sbr.rel (0) target = $region17
    $region16: #{text2image_forward.1} parent=1 // pred_region
      _
    $region17: #{text2image_forward.1} parent=1 // pred_fallthru
      _
    // Predicated region
    $region18: #{text2image_forward.1} parent=1 // pred_check
      _
    $region19: #{text2image_forward.1} parent=1 // pred_check_branch
      %20 = sbr.rel (0) target = $region21
    $region20: #{text2image_forward.1} parent=1 // pred_region
      %s22 = ssub.s32 16, 16
      %23 = vsyncadd [#allocation3], %s22
      %s25 = sshll.u32 %s4, 4
      %s26 = int_to_ptr.vmem [resolvable:$true] %s25
      %28 = dma.vmem_to_smem %s26, 16, [#allocation2], [#allocation3]
    $region21: #{text2image_forward.1} parent=1 // pred_fallthru
      _
    // Predicated region
    $region22: #{text2image_forward.1} parent=1 // pred_check
      _
    $region23: #{text2image_forward.1} parent=1 // pred_check_branch
      %30 = sbr.rel (0) target = $region25
    $region24: #{text2image_forward.1} parent=1 // pred_region
      %31 = dma.done [#allocation3], 16
    $region25: #{text2image_forward.1} parent=1 // pred_fallthru
      _
    %32 = sfence
    %v33 = vld [vmem:[%s0] sm:$0xff]
    %v34 = vld [vmem:[%s0 + $0x8] sm:$0xff]
    %v35 = vld [vmem:[%s1] sm:$0xff]
    %v36 = vld [vmem:[%s2] sm:$0xff]
    %v37 = vld [vmem:[%s3] sm:$0xff]
    %v38 = vld [vmem:[%s3 + $0x8] sm:$0xff]
    %v39 = vld [vmem:[%s3 + $0x10] sm:$0xff]
    %v40 = vld [vmem:[%s3 + $0x18] sm:$0xff]
    %v41 = vld [vmem:[%s3 + $0x20] sm:$0xff]
    %v42 = vld [vmem:[%s3 + $0x28] sm:$0xff]
    %v43 = vld [vmem:[%s3 + $0x30] sm:$0xff]
    %v44 = vld [vmem:[%s3 + $0x38] sm:$0xff]
    %vm45 = vcmask 523264
    %v47 = vsel %vm45, %v36, 0
    %49 = vmatprep.subr.mxu0 0.0
    %50 = vmatpush1.msra.mxu0 0.0
    %51 = vmatprep.subr.mxu0 0.0
    %52 = vmatpush1.msra.mxu0 0.0
    %53 = vmatprep.subr.mxu0 0.0
    %54 = vmatpush1.msra.mxu0 0.0
    %55 = vmatprep.subr.mxu0 0.0
    %56 = vmatpush1.msra.mxu0 0.0
    %57 = vmatprep.subr.mxu0 0.0
    %58 = vmatpush1.msra.mxu0 0.0
    %59 = vmatprep.subr.mxu0 0.0
    %60 = vmatpush1.msra.mxu0 0.0
    %61 = vmatprep.subr.mxu0 0.0
    %62 = vmatpush1.msra.mxu0 0.0
    %63 = vmatprep.subr.mxu0 0.0
    %64 = vmatpush1.msra.mxu0 0.0
    %65 = vmatprep.subr.mxu0 0.0
    %66 = vmatpush1.msra.mxu0 %v44
    %67 = vmatprep.subr.mxu0 0.0
    %68 = vmatpush1.msra.mxu0 %v43
    %69 = vmatprep.subr.mxu0 0.0
    %70 = vmatpush1.msra.mxu0 %v42
    %71 = vmatprep.subr.mxu0 0.0
    %72 = vmatpush1.msra.mxu0 %v41
    %73 = vmatprep.subr.mxu0 0.0
    %74 = vmatpush1.msra.mxu0 %v40
    %75 = vmatprep.subr.mxu0 0.0
    %76 = vmatpush1.msra.mxu0 %v39
    %77 = vmatprep.subr.mxu0 0.0
    %78 = vmatpush1.msra.mxu0 %v38
    %79 = vmatprep.subr.mxu0 0.0
    %80 = vmatpush1.msra.mxu0 %v37
    %81 = vmatprep.subr.mxu0 0.0
    %82 = vmatpush2.msra.mxu0 0.0
    %83 = vmatprep.subr.mxu0 0.0
    %84 = vmatpush2.msra.mxu0 0.0
    %85 = vmatprep.subr.mxu0 0.0
    %86 = vmatpush2.msra.mxu0 0.0
    %87 = vmatprep.subr.mxu0 0.0
    %88 = vmatpush2.msra.mxu0 0.0
    %89 = vmatprep.subr.mxu0 0.0
    %90 = vmatpush2.msra.mxu0 0.0
    %91 = vmatprep.subr.mxu0 0.0
    %92 = vmatpush2.msra.mxu0 0.0
    %93 = vmatprep.subr.mxu0 0.0
    %94 = vmatpush2.msra.mxu0 0.0
    %95 = vmatprep.subr.mxu0 0.0
    %96 = vmatpush2.msra.mxu0 0.0
    %97 = vmatprep.subr.mxu0 0.0
    %98 = vmatpush2.msra.mxu0 0.0
    %99 = vmatprep.subr.mxu0 0.0
    %100 = vmatpush2.msra.mxu0 0.0
    %101 = vmatprep.subr.mxu0 0.0
    %102 = vmatpush2.msra.mxu0 0.0
    %103 = vmatprep.subr.mxu0 0.0
    %104 = vmatpush2.msra.mxu0 0.0
    %105 = vmatprep.subr.mxu0 0.0
    %106 = vmatpush2.msra.mxu0 0.0
    %107 = vmatprep.subr.mxu0 0.0
    %108 = vmatpush2.msra.mxu0 0.0
    %109 = vmatprep.subr.mxu0 0.0
    %110 = vmatpush2.msra.mxu0 0.0
    %111 = vmatprep.subr.mxu0 0.0
    %112 = vmatpush2.msra.mxu0 0.0
    %113 = vmatprep.mubr.f32.mxu0 0.0
    %114 = vmatmul.mubr.f32.gmra.mxu0 %v47
    %v115 = vpop.f32.mrf.mxu0
    %v116 = vadd.f32 0.0, %v115
    %v117 = vpop.f32.mrf.mxu0
    %118 = vdwg.mxu0
    %s119 = sld [smem:[#allocation2 + $0x2]]
    %s120 = sld [smem:[#allocation2 + $0x3]]
    %122 = vrot.lane.b32.xlu0 %v116, 127
    %v123 = vpop.permute.xlu0 %122
    %v125 = vsub.f32 %v116, %v123
    %v126 = vstv %s119
    %v127 = vmul.f32 %v126, %v125
    %129 = vrot.lane.b32.xlu0 %v127, 1
    %v130 = vpop.permute.xlu0 %129
    %v132 = vadd.f32 %v116, %v130
    %v133 = vstv %s120
    %v134 = vadd.f32 %v132, %v133
    %s135 = sld [smem:[#allocation2]]
    %s136 = sld [smem:[#allocation2 + $0x1]]
    %v137 = vstv %s135
    %v138 = vmul.f32 %v33, %v137
    %v139 = vmul.f32 %v34, %v137
    %141 = vset.pattern.permute.xlu0 1
    %142 = vperm.xlu0 %141, %v134
    %v143 = vpop.permute.xlu0 %142
    %vm145 = vcmask 64512
    %v147 = vsel %vm145, %v35, 0
    %149 = vmatprep.subr.mxu0 0.0
    %150 = vmatpush1.msra.mxu0 0.0
    %151 = vmatprep.subr.mxu0 0.0
    %152 = vmatpush1.msra.mxu0 0.0
    %153 = vmatprep.subr.mxu0 0.0
    %154 = vmatpush1.msra.mxu0 0.0
    %155 = vmatprep.subr.mxu0 0.0
    %156 = vmatpush1.msra.mxu0 0.0
    %157 = vmatprep.subr.mxu0 0.0
    %158 = vmatpush1.msra.mxu0 0.0
    %159 = vmatprep.subr.mxu0 0.0
    %160 = vmatpush1.msra.mxu0 0.0
    %161 = vmatprep.subr.mxu0 0.0
    %162 = vmatpush1.msra.mxu0 0.0
    %163 = vmatprep.subr.mxu0 0.0
    %164 = vmatpush1.msra.mxu0 0.0
    %165 = vmatprep.subr.mxu0 0.0
    %166 = vmatpush1.msra.mxu0 0.0
    %167 = vmatprep.subr.mxu0 0.0
    %168 = vmatpush1.msra.mxu0 0.0
    %169 = vmatprep.subr.mxu0 0.0
    %170 = vmatpush1.msra.mxu0 0.0
    %171 = vmatprep.subr.mxu0 0.0
    %172 = vmatpush1.msra.mxu0 0.0
    %173 = vmatprep.subr.mxu0 0.0
    %174 = vmatpush1.msra.mxu0 0.0
    %175 = vmatprep.subr.mxu0 0.0
    %176 = vmatpush1.msra.mxu0 0.0
    %177 = vmatprep.subr.mxu0 0.0
    %178 = vmatpush1.msra.mxu0 0.0
    %179 = vmatprep.subr.mxu0 %v34
    %180 = vmatpush1.msra.mxu0 %v33
    %181 = vmatprep.subr.mxu0 0.0
    %182 = vmatpush2.msra.mxu0 0.0
    %183 = vmatprep.subr.mxu0 0.0
    %184 = vmatpush2.msra.mxu0 0.0
    %185 = vmatprep.subr.mxu0 0.0
    %186 = vmatpush2.msra.mxu0 0.0
    %187 = vmatprep.subr.mxu0 0.0
    %188 = vmatpush2.msra.mxu0 0.0
    %189 = vmatprep.subr.mxu0 0.0
    %190 = vmatpush2.msra.mxu0 0.0
    %191 = vmatprep.subr.mxu0 0.0
    %192 = vmatpush2.msra.mxu0 0.0
    %193 = vmatprep.subr.mxu0 0.0
    %194 = vmatpush2.msra.mxu0 0.0
    %195 = vmatprep.subr.mxu0 0.0
    %196 = vmatpush2.msra.mxu0 0.0
    %197 = vmatprep.subr.mxu0 0.0
    %198 = vmatpush2.msra.mxu0 0.0
    %199 = vmatprep.subr.mxu0 0.0
    %200 = vmatpush2.msra.mxu0 0.0
    %201 = vmatprep.subr.mxu0 0.0
    %202 = vmatpush2.msra.mxu0 0.0
    %203 = vmatprep.subr.mxu0 0.0
    %204 = vmatpush2.msra.mxu0 0.0
    %205 = vmatprep.subr.mxu0 0.0
    %206 = vmatpush2.msra.mxu0 0.0
    %207 = vmatprep.subr.mxu0 0.0
    %208 = vmatpush2.msra.mxu0 0.0
    %209 = vmatprep.subr.mxu0 0.0
    %210 = vmatpush2.msra.mxu0 0.0
    %211 = vmatprep.subr.mxu0 0.0
    %212 = vmatpush2.msra.mxu0 0.0
    %213 = vmatprep.mubr.f32.mxu0 0.0
    %214 = vmatmul.mubr.f32.gmra.mxu0 %v147
    %v215 = vpop.f32.mrf.mxu0
    %v216 = vadd.f32 %v143, %v215
    %v217 = vpop.f32.mrf.mxu0
    %v218 = vadd.f32 %v143, %v217
    %219 = vdwg.mxu0
    %v220 = vstv %s136
    %v221 = vmul.f32 %v220, %v216
    %v222 = vmul.f32 %v220, %v218
    %v223 = vsub.f32 %v138, %v221
    %v224 = vsub.f32 %v139, %v222
    %225 = vst [vmem:[%s5] sm:$0xff] %v223
    %226 = vst [vmem:[%s5 + $0x8] sm:$0xff] %v224
    // Predicated region
    $region26: #{text2image_forward.1} parent=1 // pred_check
      _
    $region27: #{text2image_forward.1} parent=1 // pred_check_branch
      %228 = sbr.rel (0) target = $region29
    $region28: #{text2image_forward.1} parent=1 // pred_region
      _
    $region29: #{text2image_forward.1} parent=1 // pred_fallthru
      _
    // Predicated region
    $region30: #{text2image_forward.1} parent=1 // pred_check
      _
    $region31: #{text2image_forward.1} parent=1 // pred_check_branch
      %230 = sbr.rel (0) target = $region33
    $region32: #{text2image_forward.1} parent=1 // pred_region
      _
    $region33: #{text2image_forward.1} parent=1 // pred_fallthru
      _
    %231 = vsyncpa [#allocation3], 1

</llo_original>
